<compile_context>
chip_gen: v6e
topology: v6e:2x2x1
jax: 0.10.0
libtpu: 0.0.40
codegen_flags: <defaults>
</compile_context>

<pallas_src>
import jax
import jax.numpy as jnp
from jax.experimental import pallas as pl
from jax.experimental.pallas import tpu as pltpu


def _repeat_affine_kernel(x_ref, w_ref, b_ref, o_ref):
    # x_ref: (RT, CT)   w_ref, b_ref: (RT, 1)   o_ref: (R, RT, CT)
    # Compute the transform ONCE, then broadcast it across the repeat axis of
    # the output block (single large lane-dense store).
    y = x_ref[...] * w_ref[...] + b_ref[...]          # VPU affine (the "transform")
    y = y.astype(o_ref.dtype)
    o_ref[...] = jnp.broadcast_to(y[None, :, :], o_ref.shape)


def _pick_tile(dim, target, quantum):
    """Largest tile <= target that is a multiple of `quantum` and divides `dim`,
    else the full dim (full-extent blocks are always legal)."""
    if dim <= target:
        return dim
    t = (target // quantum) * quantum
    while t >= quantum:
        if dim % t == 0:
            return t
        t -= quantum
    return dim


def repeat_transform(x, weight, bias, num_repeats):
    """x: (N, C, H, W); weight, bias: (C,). Returns (R, N, C, H, W)."""
    N, C, H, W = x.shape
    NC, HW = N * C, H * W
    x2 = x.reshape(NC, HW)

    # Per-(n,c) row scale/shift: broadcast channel params over batch (no tile).
    w2 = jnp.broadcast_to(weight[None, :], (N, C)).reshape(NC, 1).astype(x.dtype)
    b2 = jnp.broadcast_to(bias[None, :], (N, C)).reshape(NC, 1).astype(x.dtype)

    # Tile the flattened (NC, HW) view: sublane-aligned rows, lane-dense cols.
    # Targets are sized so that R x rows x cols (double-buffered) stays well
    # under the smallest scoped-VMEM default (v7x: 32 MiB of 64 MiB physical).
    row_tile = _pick_tile(NC, 256, 8)
    col_tile = _pick_tile(HW, 2048, 128)
    grid = (NC // row_tile, HW // col_tile)

    # Estimate buffered VMEM; only raise the scoped limit if we actually need to.
    itemsize = jnp.dtype(x.dtype).itemsize
    in_bytes = row_tile * col_tile * itemsize + 2 * row_tile * itemsize
    out_bytes = num_repeats * row_tile * col_tile * itemsize
    needed = 2 * (in_bytes + out_bytes)               # double-buffered in + out
    cp_kwargs = dict(dimension_semantics=("parallel", "parallel"))
    if needed > (24 << 20):
        cp_kwargs["vmem_limit_bytes"] = min(int(needed * 5 // 4), 48 << 20)

    out = pl.pallas_call(
        _repeat_affine_kernel,
        out_shape=jax.ShapeDtypeStruct((num_repeats, NC, HW), x.dtype),
        grid_spec=pltpu.PrefetchScalarGridSpec(
            num_scalar_prefetch=0,
            grid=grid,
            in_specs=[
                pl.BlockSpec((row_tile, col_tile), lambda i, j: (i, j)),
                pl.BlockSpec((row_tile, 1), lambda i, j: (i, 0)),
                pl.BlockSpec((row_tile, 1), lambda i, j: (i, 0)),
            ],
            # Repeat axis folded into the block: full R in every output tile.
            out_specs=pl.BlockSpec(
                (num_repeats, row_tile, col_tile), lambda i, j: (0, i, j)
            ),
        ),
        compiler_params=pltpu.CompilerParams(**cp_kwargs),
    )(x2, w2, b2)

    return out.reshape(num_repeats, N, C, H, W)


if __name__ == "__main__":
    key = jax.random.PRNGKey(0)
    N, C, H, W = 2, 4, 16, 16
    num_repeats = 3

    x = jax.random.normal(key, (N, C, H, W), dtype=jnp.float32)
    # Deterministic "transform" parameters (per-channel affine).
    weight = 1.0 + 0.1 * jnp.arange(C, dtype=jnp.float32)
    bias = 0.01 * jnp.arange(C, dtype=jnp.float32)

    out = repeat_transform(x, weight, bias, num_repeats)
    out = jax.block_until_ready(out)

    # Reference check (plain JAX): transform applied R times, stacked on dim 0.
    ref_one = x * weight[None, :, None, None] + bias[None, :, None, None]
    ref = jnp.stack([ref_one] * num_repeats, axis=0)
    assert out.shape == (num_repeats, N, C, H, W), out.shape
    assert jnp.allclose(out, ref, atol=1e-6), "mismatch vs reference"

    print("KERNEL_OK")
</pallas_src>

<mosaic_0001>
module attributes {stable_mosaic.version = 11 : i64} {
  func.func @_repeat_affine_kernel(%arg0: i32, %arg1: i32, %arg2: memref<8x256xf32, #tpu.memory_space<vmem>>, %arg3: memref<8x1xf32, #tpu.memory_space<vmem>>, %arg4: memref<8x1xf32, #tpu.memory_space<vmem>>, %arg5: memref<3x8x256xf32, #tpu.memory_space<vmem>>) attributes {dimension_semantics = [#tpu.dimension_semantics<parallel>, #tpu.dimension_semantics<parallel>], iteration_bounds = array<i64: 1, 1>, scalar_prefetch = 0 : i64, scratch_operands = 0 : i64, tpu.core_type = #tpu.core_type<tc>, window_params = [{transform_indices = @transform_0, window_bounds = array<i64: 8, 256>}, {transform_indices = @transform_1, window_bounds = array<i64: 8, 1>}, {transform_indices = @transform_2, window_bounds = array<i64: 8, 1>}, {transform_indices = @transform_3, window_bounds = array<i64: 3, 8, 256>}]} {
    %c0 = arith.constant 0 : index
    %c0_0 = arith.constant 0 : index
    %0 = vector.load %arg2[%c0, %c0_0] : memref<8x256xf32, #tpu.memory_space<vmem>>, vector<8x256xf32>
    %c0_1 = arith.constant 0 : index
    %c0_2 = arith.constant 0 : index
    %1 = vector.load %arg3[%c0_1, %c0_2] : memref<8x1xf32, #tpu.memory_space<vmem>>, vector<8x1xf32>
    %2 = vector.broadcast %1 : vector<8x1xf32> to vector<8x256xf32>
    %3 = arith.mulf %0, %2 : vector<8x256xf32>
    %c0_3 = arith.constant 0 : index
    %c0_4 = arith.constant 0 : index
    %4 = vector.load %arg4[%c0_3, %c0_4] : memref<8x1xf32, #tpu.memory_space<vmem>>, vector<8x1xf32>
    %5 = vector.broadcast %4 : vector<8x1xf32> to vector<8x256xf32>
    %6 = arith.addf %3, %5 : vector<8x256xf32>
    %7 = vector.shape_cast %6 : vector<8x256xf32> to vector<1x8x256xf32>
    %8 = vector.shape_cast %7 : vector<1x8x256xf32> to vector<1x8x256xf32>
    %9 = vector.broadcast %8 : vector<1x8x256xf32> to vector<3x8x256xf32>
    %c0_5 = arith.constant 0 : index
    %c0_6 = arith.constant 0 : index
    %c0_7 = arith.constant 0 : index
    %10 = vector.load %arg5[%c0_5, %c0_6, %c0_7] : memref<3x8x256xf32, #tpu.memory_space<vmem>>, vector<3x8x256xf32>
    tpu.vector_store %arg5[%c0_5, %c0_6, %c0_7], %9 {strides = array<i32>} : memref<3x8x256xf32, #tpu.memory_space<vmem>>, vector<3x8x256xf32>,
    return
  }
  func.func @transform_0(%arg0: i32, %arg1: i32) -> (i32, i32) {
    %c0_i32 = arith.constant 0 : i32
    return %arg0, %arg1 : i32, i32
  }
  func.func @transform_1(%arg0: i32, %arg1: i32) -> (i32, i32) {
    %c0_i32 = arith.constant 0 : i32
    %c0_i32_0 = arith.constant 0 : i32
    return %arg0, %c0_i32 : i32, i32
  }
  func.func @transform_2(%arg0: i32, %arg1: i32) -> (i32, i32) {
    %c0_i32 = arith.constant 0 : i32
    %c0_i32_0 = arith.constant 0 : i32
    return %arg0, %c0_i32 : i32, i32
  }
  func.func @transform_3(%arg0: i32, %arg1: i32) -> (i32, i32, i32) {
    %c0_i32 = arith.constant 0 : i32
    %c0_i32_0 = arith.constant 0 : i32
    return %c0_i32, %arg0, %arg1 : i32, i32, i32
  }
}

</mosaic_0001>

<llo_original>
// kernel: tpu_custom_call.1
$region0: #{tpu_custom_call.1}
  #allocation0 [shape = 'u32[]', space=smem, size = 0x4, offset = 0x4, fixed_abs, tag = 'smem constant byte address 0x4 - core index']
  #allocation1 [shape = 'u32[144,128]{1,0:T(1,128)}', space=vmem, size = 0x12000, scoped, tag = 'internal scratch']
  %s0 = inlined_call_operand.vmem [shape: f32[8,256], index: 0, kind: input, shape index: {}]
  %s1 = inlined_call_operand.vmem [shape: f32[8,1], index: 1, kind: input, shape index: {}]
  %s2 = inlined_call_operand.vmem [shape: f32[8,1], index: 2, kind: input, shape index: {}]
  %s3 = inlined_call_operand.hbm [shape: f32[3,8,256], index: 3, kind: output, shape index: {}]
  %s4 = sld [smem:[#allocation0]]
  $region22: #{tpu_custom_call.1} parent=0
    _
  %s6 = ssub.s32 1, %s4
  %s7 = scalar_select 0, %s6, %s4
  $region1: #{tpu_custom_call.1} parent=0
    #allocation2 [shape = 'u8[24576]{0}', space=vmem, size = 0x6000, scoped, tag = 'output window, operand 0, single buffered']
    #allocation3 [shape = 's32[1]{0}', space=sflag, size = 0x4, scoped, tag = 'scoped memory for tpu_custom_call.1']
    %8 = vsyncpa [#allocation3], 0
    // Predicated region
    $region2: #{tpu_custom_call.1} parent=1 // pred_check
      _
    $region3: #{tpu_custom_call.1} parent=1 // pred_check_branch
      %10 = sbr.rel (0) target = $region5
    $region4: #{tpu_custom_call.1} parent=1 // pred_region
      _
    $region5: #{tpu_custom_call.1} parent=1 // pred_fallthru
      _
    // Predicated region
    $region6: #{tpu_custom_call.1} parent=1 // pred_check
      _
    $region7: #{tpu_custom_call.1} parent=1 // pred_check_branch
      %12 = sbr.rel (0) target = $region9
    $region8: #{tpu_custom_call.1} parent=1 // pred_region
      _
    $region9: #{tpu_custom_call.1} parent=1 // pred_fallthru
      _
    // Predicated region
    $region10: #{tpu_custom_call.1} parent=1 // pred_check
      _
    $region11: #{tpu_custom_call.1} parent=1 // pred_check_branch
      %14 = sbr.rel (0) target = $region13
    $region12: #{tpu_custom_call.1} parent=1 // pred_region
      _
    $region13: #{tpu_custom_call.1} parent=1 // pred_fallthru
      _
    %v15 = vld [vmem:[%s0] sm:$0xff]
    %v16 = vld [vmem:[%s0 + $0x8] sm:$0xff]
    %v17 = vld [vmem:[%s1] sm:$0xff]
    %19 = vset.pattern.permute.xlu0 0
    %20 = vperm.xlu0 %19, %v17
    %v21 = vpop.permute.xlu0 %20
    %v23 = vmul.f32 %v15, %v21
    %v24 = vmul.f32 %v16, %v21
    %v25 = vld [vmem:[%s2] sm:$0xff]
    %27 = vset.pattern.permute.xlu0 0
    %28 = vperm.xlu0 %27, %v25
    %v29 = vpop.permute.xlu0 %28
    %v31 = vadd.f32 %v23, %v29
    %v32 = vadd.f32 %v24, %v29
    %33 = vst [vmem:[#allocation2] sm:$0xff] %v31
    %34 = vst [vmem:[#allocation2 + $0x8] sm:$0xff] %v32
    %35 = vst [vmem:[#allocation2 + $0x10] sm:$0xff] %v31
    %36 = vst [vmem:[#allocation2 + $0x18] sm:$0xff] %v32
    %37 = vst [vmem:[#allocation2 + $0x20] sm:$0xff] %v31
    %38 = vst [vmem:[#allocation2 + $0x28] sm:$0xff] %v32
    // Predicated region
    $region14: #{tpu_custom_call.1} parent=1 // pred_check
      _
    $region15: #{tpu_custom_call.1} parent=1 // pred_check_branch
      %40 = sbr.rel (0) target = $region17
    $region16: #{tpu_custom_call.1} parent=1 // pred_region
      %s42 = ssub.s32 768, 768
      %43 = vsyncadd [#allocation3], %s42
      %s44 = sshll.u32 [#allocation2], 4
      %s45 = int_to_ptr.vmem [resolvable:$true] %s44
      %50 = dma.vmem_to_hbm [thread:$0]  %s45, 768, %s3, [#allocation3], 256, 256, 16
    $region17: #{tpu_custom_call.1} parent=1 // pred_fallthru
      _
    // Predicated region
    $region18: #{tpu_custom_call.1} parent=1 // pred_check
      _
    $region19: #{tpu_custom_call.1} parent=1 // pred_check_branch
      %52 = sbr.rel (0) target = $region21
    $region20: #{tpu_custom_call.1} parent=1 // pred_region
      %53 = dma.done [#allocation3], 768
    $region21: #{tpu_custom_call.1} parent=1 // pred_fallthru
      _
    %54 = vsyncpa [#allocation3], 1

</llo_original>
